<compile_context>
chip_gen: v6e
topology: v6e:2x2x1
jax: 0.10.0
libtpu: 0.0.40
codegen_flags: <defaults>
</compile_context>

<pallas_src>
import functools

import jax
import jax.numpy as jnp
from jax.experimental import pallas as pl
from jax.experimental.pallas import tpu as pltpu


def _round_up(x, m):
    return (x + m - 1) // m * m


def _sublane_multiple(dtype):
    itemsize = jnp.dtype(dtype).itemsize
    return {4: 8, 2: 16, 1: 32}.get(itemsize, 8)


def _vmem_capacity_bytes():
    try:
        cap = int(getattr(pltpu.get_tpu_info(), "vmem_capacity_bytes"))
        if cap > 0:
            return cap
    except Exception:
        pass
    return 64 * 1024 * 1024  # conservative (v7x-sized) fallback


def _block_spec(shape, index_map, buffers=None):
    """BlockSpec helper; applies pipeline_mode=pl.Buffered(n) when supported."""
    if buffers is None:
        return pl.BlockSpec(shape, index_map)
    try:
        return pl.BlockSpec(shape, index_map, pipeline_mode=pl.Buffered(buffers))
    except Exception:  # older jax without pipeline_mode: fall back to default
        return pl.BlockSpec(shape, index_map)


def _ffn_kernel(x_ref, w1_ref, b1_ref, w2_ref, b2_ref, o_ref, acc_ref):
    # grid = (row_tiles, d_ff_chunks); the d_ff chunk axis is a reduction axis.
    # x_ref:  (tm, d_model_p)
    # w1_ref: (d_model_p, tff)   b1_ref: (1, tff)
    # w2_ref: (tff, d_model_p)   b2_ref: (1, d_model_p)
    # o_ref:  (tm, d_model_p)    acc_ref: (tm, d_model_p) f32 scratch
    k = pl.program_id(1)

    @pl.when(k == 0)
    def _():
        acc_ref[...] = jnp.zeros_like(acc_ref)

    # Matmuls in the operands' native dtype (bf16 -> native MXU path),
    # accumulate in f32.
    h = jnp.dot(x_ref[...], w1_ref[...], preferred_element_type=jnp.float32)
    h = h + b1_ref[...].astype(jnp.float32)
    h = jnp.maximum(h, 0.0)                       # ReLU
    # dropout(p=0.01) -> identity in eval mode.
    h = h.astype(w2_ref.dtype)                    # back to bf16/f32 for the MXU
    acc_ref[...] += jnp.dot(h, w2_ref[...], preferred_element_type=jnp.float32)

    @pl.when(k == pl.num_programs(1) - 1)
    def _():
        o_ref[...] = (acc_ref[...] + b2_ref[...].astype(jnp.float32)
                      ).astype(o_ref.dtype)


@functools.partial(jax.jit, static_argnames=("tm", "tff"))
def feed_forward(x, w1, b1, w2, b2, *, tm=None, tff=None):
    """x: (batch, seq, d_model) -> (batch, seq, d_model).

    w1: (d_model, d_ff), b1: (d_ff,), w2: (d_ff, d_model), b2: (d_model,)
    (weights pre-transposed to (in_features, out_features), i.e. x @ W + b).
    tm / tff override the automatically chosen row tile / d_ff chunk.
    """
    batch, seq, d_model = x.shape
    d_ff = w1.shape[1]
    m = batch * seq

    x_item = jnp.dtype(x.dtype).itemsize
    w_item = jnp.dtype(w1.dtype).itemsize
    sub = _sublane_multiple(x.dtype)

    d_model_p = _round_up(d_model, 128)
    d_ff_p = _round_up(d_ff, 128)

    cap = _vmem_capacity_bytes()
    # Leave headroom for compiler-internal scratch; cap the scoped window.
    budget = min(cap - (12 << 20), 96 << 20)

    if tm is None:
        tm = 512 if cap >= (96 << 20) else 256   # bigger tiles on 128-MiB chips
    tm_eff = _round_up(min(tm, _round_up(m, sub)), sub)

    def vmem_need(tm_, tff_, wbufs):
        return (2 * tm_ * d_model_p * x_item          # x tile (double-buffered)
                + 2 * tm_ * d_model_p * x_item        # out tile (double-buffered)
                + wbufs * d_model_p * tff_ * w_item   # W1 chunk
                + wbufs * tff_ * d_model_p * w_item   # W2 chunk
                + wbufs * (tff_ + d_model_p) * w_item # b1, b2
                + tm_ * d_model_p * 4                 # f32 accumulator scratch
                + tm_ * tff_ * 4)                     # f32 ReLU intermediate

    def pick_tff(tm_):
        # Largest 128-multiple divisor of d_ff_p that fits the VMEM budget.
        # Single chunk -> weights single-buffered (constant index map);
        # multiple chunks -> default double-buffer so weight DMA overlaps MXU.
        q = d_ff_p // 128
        for d in range(q, 0, -1):
            if q % d:
                continue
            cand = 128 * d
            if vmem_need(tm_, cand, 1 if d == q else 2) <= budget:
                return cand
        return None

    if tff is None:
        tff_eff = pick_tff(tm_eff)
        while tff_eff is None and tm_eff > sub:
            tm_eff = max(sub, _round_up(tm_eff // 2, sub))
            tff_eff = pick_tff(tm_eff)
        if tff_eff is None:
            tff_eff = 128                             # last resort
    else:
        tff_eff = _round_up(max(min(tff, d_ff_p), 128), 128)
        while d_ff_p % tff_eff:
            tff_eff -= 128

    n_k = d_ff_p // tff_eff
    w_bufs = 1 if n_k == 1 else None                  # None -> default (2)

    # Lane-dim padding only (multiples of 128).  Row dim is handled by partial
    # boundary blocks (grid uses cdiv) -> no pad/slice HBM round-trip on x/out.
    x2d = x.reshape(m, d_model)
    if d_model_p != d_model:
        x2d = jnp.pad(x2d, ((0, 0), (0, d_model_p - d_model)))
        w1 = jnp.pad(w1, ((0, d_model_p - d_model), (0, 0)))
        w2 = jnp.pad(w2, ((0, 0), (0, d_model_p - d_model)))
        b2 = jnp.pad(b2, (0, d_model_p - d_model))
    if d_ff_p != d_ff:
        w1 = jnp.pad(w1, ((0, 0), (0, d_ff_p - d_ff)))
        w2 = jnp.pad(w2, ((0, d_ff_p - d_ff), (0, 0)))
        b1 = jnp.pad(b1, (0, d_ff_p - d_ff))
    b1 = b1.reshape(1, d_ff_p)
    b2 = b2.reshape(1, d_model_p)

    grid = (pl.cdiv(m, tm_eff), n_k)

    need = vmem_need(tm_eff, tff_eff, 1 if n_k == 1 else 2)
    vmem_limit = int(min(budget, max(need + (8 << 20), 32 << 20)))

    cost = pl.CostEstimate(
        flops=2 * m * d_model_p * d_ff_p * 2,          # two matmuls
        transcendentals=0,
        bytes_accessed=(x2d.size * x_item
                        + (w1.size + w2.size + b1.size + b2.size) * w_item
                        + m * d_model_p * x_item),
    )

    out2d = pl.pallas_call(
        _ffn_kernel,
        out_shape=jax.ShapeDtypeStruct((m, d_model_p), x.dtype),
        grid_spec=pltpu.PrefetchScalarGridSpec(
            num_scalar_prefetch=0,
            grid=grid,
            in_specs=[
                _block_spec((tm_eff, d_model_p), lambda i, k: (i, 0)),           # x
                _block_spec((d_model_p, tff_eff), lambda i, k: (0, k), w_bufs),  # W1
                _block_spec((1, tff_eff), lambda i, k: (0, k), w_bufs),          # b1
                _block_spec((tff_eff, d_model_p), lambda i, k: (k, 0), w_bufs),  # W2
                _block_spec((1, d_model_p), lambda i, k: (0, 0), 1),             # b2
            ],
            out_specs=pl.BlockSpec((tm_eff, d_model_p), lambda i, k: (i, 0)),
            scratch_shapes=[pltpu.VMEM((tm_eff, d_model_p), jnp.float32)],
        ),
        compiler_params=pltpu.CompilerParams(
            dimension_semantics=("parallel", "arbitrary"),
            vmem_limit_bytes=vmem_limit,
        ),
        cost_estimate=cost,
    )(x2d, w1, b1, w2, b2)

    if d_model_p != d_model:
        out2d = out2d[:, :d_model]
    return out2d.reshape(batch, seq, d_model)


def init_params(key, d_model, d_ff, dtype=jnp.float32):
    """Deterministic PyTorch-style nn.Linear init (uniform +/- 1/sqrt(fan_in)).

    Weights are returned pre-transposed to (in_features, out_features)."""
    k1, k2, k3, k4 = jax.random.split(key, 4)
    bound1 = 1.0 / jnp.sqrt(jnp.asarray(d_model, dtype=jnp.float32))
    bound2 = 1.0 / jnp.sqrt(jnp.asarray(d_ff, dtype=jnp.float32))
    w1 = jax.random.uniform(k1, (d_model, d_ff), dtype, -bound1, bound1)
    b1 = jax.random.uniform(k2, (d_ff,), dtype, -bound1, bound1)
    w2 = jax.random.uniform(k3, (d_ff, d_model), dtype, -bound2, bound2)
    b2 = jax.random.uniform(k4, (d_model,), dtype, -bound2, bound2)
    return w1, b1, w2, b2


def _ref(x, w1, b1, w2, b2):
    # eval-mode dropout = identity
    xf, w1f, b1f = (a.astype(jnp.float32) for a in (x, w1, b1))
    w2f, b2f = (a.astype(jnp.float32) for a in (w2, b2))
    return jnp.maximum(xf @ w1f + b1f, 0.0) @ w2f + b2f


if __name__ == "__main__":
    # --- test 1: f32, lane padding + ragged row tiles (small explicit tm) ---
    batch, seq, d_model, d_ff = 2, 12, 32, 64
    key = jax.random.PRNGKey(0)
    kx, kp = jax.random.split(key)
    x = jax.random.normal(kx, (batch, seq, d_model), jnp.float32)
    w1, b1, w2, b2 = init_params(kp, d_model, d_ff)

    out = jax.block_until_ready(feed_forward(x, w1, b1, w2, b2, tm=16))
    ref = _ref(x, w1, b1, w2, b2)
    assert out.shape == (batch, seq, d_model)
    assert jnp.allclose(out, ref, atol=1e-4, rtol=1e-4)

    # --- test 2: bf16, lane-aligned dims, auto tile sizes ---
    b2_, s2, dm2, dff2 = 2, 64, 128, 256
    kx2, kp2 = jax.random.split(jax.random.PRNGKey(0), 2)
    x2 = jax.random.normal(kx2, (b2_, s2, dm2), jnp.float32)
    p2 = init_params(kp2, dm2, dff2)
    xb = x2.astype(jnp.bfloat16)
    pb = tuple(a.astype(jnp.bfloat16) for a in p2)

    out_b = jax.block_until_ready(feed_forward(xb, *pb))
    ref_b = _ref(xb, *pb)
    assert out_b.shape == (b2_, s2, dm2)
    assert jnp.allclose(out_b.astype(jnp.float32), ref_b, atol=1e-1, rtol=1e-1)

    # --- test 3: f32, forced d_ff chunking (exercises the accumulator path) ---
    b3, s3, dm3, dff3 = 2, 16, 128, 512
    kx3, kp3 = jax.random.split(jax.random.PRNGKey(0), 2)
    x3 = jax.random.normal(kx3, (b3, s3, dm3), jnp.float32)
    p3 = init_params(kp3, dm3, dff3)

    out_c = jax.block_until_ready(feed_forward(x3, *p3, tff=128))  # 4 chunks
    ref_c = _ref(x3, *p3)
    assert out_c.shape == (b3, s3, dm3)
    assert jnp.allclose(out_c, ref_c, atol=1e-4, rtol=1e-4)

    print("KERNEL_OK")
</pallas_src>

<mosaic_0001>
module attributes {stable_mosaic.version = 11 : i64} {
  func.func @_ffn_kernel(%arg0: i32, %arg1: i32, %arg2: memref<16x128xf32, #tpu.memory_space<vmem>>, %arg3: memref<128x128xf32, #tpu.memory_space<vmem>>, %arg4: memref<1x128xf32, #tpu.memory_space<vmem>>, %arg5: memref<128x128xf32, #tpu.memory_space<vmem>>, %arg6: memref<1x128xf32, #tpu.memory_space<vmem>>, %arg7: memref<16x128xf32, #tpu.memory_space<vmem>>, %arg8: memref<16x128xf32, #tpu.memory_space<vmem>>) attributes {dimension_semantics = [#tpu.dimension_semantics<parallel>, #tpu.dimension_semantics<arbitrary>], iteration_bounds = array<i64: 2, 1>, scalar_prefetch = 0 : i64, scratch_operands = 1 : i64, tpu.core_type = #tpu.core_type<tc>, window_params = [{transform_indices = @transform_0, window_bounds = array<i64: 16, 128>}, {pipeline_mode = #tpu.pipeline_mode<synchronous>, transform_indices = @transform_1, window_bounds = array<i64: 128, 128>}, {pipeline_mode = #tpu.pipeline_mode<synchronous>, transform_indices = @transform_2, window_bounds = array<i64: 1, 128>}, {pipeline_mode = #tpu.pipeline_mode<synchronous>, transform_indices = @transform_3, window_bounds = array<i64: 128, 128>}, {pipeline_mode = #tpu.pipeline_mode<synchronous>, transform_indices = @transform_4, window_bounds = array<i64: 1, 128>}, {transform_indices = @transform_5, window_bounds = array<i64: 16, 128>}]} {
    %c0_i32 = arith.constant 0 : i32
    %0 = arith.cmpi eq, %arg1, %c0_i32 : i32
    %1 = arith.extui %0 : i1 to i32
    %c0_i32_0 = arith.constant 0 : i32
    %2 = arith.cmpi ne, %1, %c0_i32_0 : i32
    scf.if %2 {
      %cst_16 = arith.constant 0.000000e+00 : f32
      %19 = vector.broadcast %cst_16 : f32 to vector<16x128xf32>
      %c0_17 = arith.constant 0 : index
      %c0_18 = arith.constant 0 : index
      %20 = vector.load %arg8[%c0_17, %c0_18] : memref<16x128xf32, #tpu.memory_space<vmem>>, vector<16x128xf32>
      tpu.vector_store %arg8[%c0_17, %c0_18], %19 {strides = array<i32>} : memref<16x128xf32, #tpu.memory_space<vmem>>, vector<16x128xf32>,
    } else {
    }
    %c0 = arith.constant 0 : index
    %c0_1 = arith.constant 0 : index
    %3 = vector.load %arg2[%c0, %c0_1] : memref<16x128xf32, #tpu.memory_space<vmem>>, vector<16x128xf32>
    %c0_2 = arith.constant 0 : index
    %c0_3 = arith.constant 0 : index
    %4 = vector.load %arg3[%c0_2, %c0_3] : memref<128x128xf32, #tpu.memory_space<vmem>>, vector<128x128xf32>
    %cst = arith.constant dense<0.000000e+00> : vector<16x128xf32>
    %5 = tpu.matmul %3, %4, %cst {dimension_numbers = #tpu.dot_dimension_numbers<[1], [0], [0], [1], [0, 0, 1, 1], [], []>} : vector<16x128xf32>, vector<128x128xf32>, vector<16x128xf32> -> vector<16x128xf32>
    %c0_4 = arith.constant 0 : index
    %c0_5 = arith.constant 0 : index
    %6 = vector.load %arg4[%c0_4, %c0_5] : memref<1x128xf32, #tpu.memory_space<vmem>>, vector<1x128xf32>
    %7 = vector.broadcast %6 : vector<1x128xf32> to vector<16x128xf32>
    %8 = arith.addf %5, %7 : vector<16x128xf32>
    %cst_6 = arith.constant 0.000000e+00 : f32
    %9 = vector.broadcast %cst_6 : f32 to vector<16x128xf32>
    %10 = arith.maximumf %8, %9 : vector<16x128xf32>
    %c0_7 = arith.constant 0 : index
    %c0_8 = arith.constant 0 : index
    %11 = vector.load %arg8[%c0_7, %c0_8] : memref<16x128xf32, #tpu.memory_space<vmem>>, vector<16x128xf32>
    %c0_9 = arith.constant 0 : index
    %c0_10 = arith.constant 0 : index
    %12 = vector.load %arg5[%c0_9, %c0_10] : memref<128x128xf32, #tpu.memory_space<vmem>>, vector<128x128xf32>
    %cst_11 = arith.constant dense<0.000000e+00> : vector<16x128xf32>
    %13 = tpu.matmul %10, %12, %cst_11 {dimension_numbers = #tpu.dot_dimension_numbers<[1], [0], [0], [1], [0, 0, 1, 1], [], []>} : vector<16x128xf32>, vector<128x128xf32>, vector<16x128xf32> -> vector<16x128xf32>
    %14 = arith.addf %11, %13 : vector<16x128xf32>
    %c0_12 = arith.constant 0 : index
    %c0_13 = arith.constant 0 : index
    %15 = vector.load %arg8[%c0_12, %c0_13] : memref<16x128xf32, #tpu.memory_space<vmem>>, vector<16x128xf32>
    tpu.vector_store %arg8[%c0_12, %c0_13], %14 {strides = array<i32>} : memref<16x128xf32, #tpu.memory_space<vmem>>, vector<16x128xf32>,
    %c0_i32_14 = arith.constant 0 : i32
    %16 = arith.cmpi eq, %arg1, %c0_i32_14 : i32
    %17 = arith.extui %16 : i1 to i32
    %c0_i32_15 = arith.constant 0 : i32
    %18 = arith.cmpi ne, %17, %c0_i32_15 : i32
    scf.if %18 {
      %c0_16 = arith.constant 0 : index
      %c0_17 = arith.constant 0 : index
      %19 = vector.load %arg8[%c0_16, %c0_17] : memref<16x128xf32, #tpu.memory_space<vmem>>, vector<16x128xf32>
      %c0_18 = arith.constant 0 : index
      %c0_19 = arith.constant 0 : index
      %20 = vector.load %arg6[%c0_18, %c0_19] : memref<1x128xf32, #tpu.memory_space<vmem>>, vector<1x128xf32>
      %21 = vector.broadcast %20 : vector<1x128xf32> to vector<16x128xf32>
      %22 = arith.addf %19, %21 : vector<16x128xf32>
      %c0_20 = arith.constant 0 : index
      %c0_21 = arith.constant 0 : index
      %23 = vector.load %arg7[%c0_20, %c0_21] : memref<16x128xf32, #tpu.memory_space<vmem>>, vector<16x128xf32>
      tpu.vector_store %arg7[%c0_20, %c0_21], %22 {strides = array<i32>} : memref<16x128xf32, #tpu.memory_space<vmem>>, vector<16x128xf32>,
    } else {
    }
    return
  }
  func.func @transform_0(%arg0: i32, %arg1: i32) -> (i32, i32) {
    %c0_i32 = arith.constant 0 : i32
    %c0_i32_0 = arith.constant 0 : i32
    return %arg0, %c0_i32 : i32, i32
  }
  func.func @transform_1(%arg0: i32, %arg1: i32) -> (i32, i32) {
    %c0_i32 = arith.constant 0 : i32
    %c0_i32_0 = arith.constant 0 : i32
    return %c0_i32, %arg1 : i32, i32
  }
  func.func @transform_2(%arg0: i32, %arg1: i32) -> (i32, i32) {
    %c0_i32 = arith.constant 0 : i32
    %c0_i32_0 = arith.constant 0 : i32
    return %c0_i32, %arg1 : i32, i32
  }
  func.func @transform_3(%arg0: i32, %arg1: i32) -> (i32, i32) {
    %c0_i32 = arith.constant 0 : i32
    %c0_i32_0 = arith.constant 0 : i32
    return %arg1, %c0_i32 : i32, i32
  }
  func.func @transform_4(%arg0: i32, %arg1: i32) -> (i32, i32) {
    %c0_i32 = arith.constant 0 : i32
    %c0_i32_0 = arith.constant 0 : i32
    %c0_i32_1 = arith.constant 0 : i32
    return %c0_i32, %c0_i32_0 : i32, i32
  }
  func.func @transform_5(%arg0: i32, %arg1: i32) -> (i32, i32) {
    %c0_i32 = arith.constant 0 : i32
    %c0_i32_0 = arith.constant 0 : i32
    return %arg0, %c0_i32 : i32, i32
  }
}

</mosaic_0001>

<llo_original>
// kernel: feed_forward.1
$region0: #{feed_forward.1}
  #allocation0 [shape = 'u32[]', space=smem, size = 0x4, offset = 0x4, fixed_abs, tag = 'smem constant byte address 0x4 - core index']
  #allocation1 [shape = 'u32[144,128]{1,0:T(1,128)}', space=vmem, size = 0x12000, scoped, tag = 'internal scratch']
  #allocation2 [shape = 'f32[16,128]{1,0:T(8,128)}', space=vmem, size = 0x2000, scoped, tag = 'scratch operand']
  %s0 = inlined_call_operand.vmem [shape: f32[24,128], index: 0, kind: input, shape index: {}]
  %s1 = inlined_call_operand.vmem [shape: f32[128,128], index: 1, kind: input, shape index: {}]
  %s2 = inlined_call_operand.vmem [shape: f32[1,128], index: 2, kind: input, shape index: {}]
  %s3 = inlined_call_operand.vmem [shape: f32[128,128], index: 3, kind: input, shape index: {}]
  %s4 = inlined_call_operand.vmem [shape: f32[1,128], index: 4, kind: input, shape index: {}]
  %s5 = inlined_call_operand.vmem [shape: f32[24,128], index: 5, kind: output, shape index: {}]
  %s6 = sld [smem:[#allocation0]]
  $region109: #{feed_forward.1} parent=0
    _
  %s8 = ssub.s32 1, %s6
  %s9 = scalar_select 0, %s8, %s6
  $region1: #{feed_forward.1} parent=0
    #allocation3 [shape = 'u8[16384]{0}', space=vmem, size = 0x4000, scoped, tag = 'output window, operand 0']
    loop: start=0, step=1, limit=4
    $region2: #{feed_forward.1} parent=1 // loop_pre_header
      _
    $region3: #{feed_forward.1} parent=1 // loop_header
      %s11 = sphi 0, %s15
      %p12 = scmp.ge.s32.totalorder %s11, 4
      %s18 = sphi 0, %s30
      %s19 = sphi 0, %s26
      %s20 = sphi 0, %s18
      %s21 = sphi 0, %s19
      %s22 = sphi 0, %s20
      %s23 = sphi 0, %s21
      %s33 = sphi 0, %s35
      %s36 = sphi 0, %s33
      %s37 = sphi 0, %s36
      %s53 = sphi 0, %s37
      %s59 = sphi 0, %s61
      %s62 = sphi 0, %s59
      %s63 = sphi 0, %s62
      %s79 = sphi 0, %s63
      %s85 = sphi 0, %s87
      %s88 = sphi 0, %s85
      %s89 = sphi 0, %s88
      %s105 = sphi 0, %s89
      %s111 = sphi 0, %s113
      %s114 = sphi 0, %s111
      %s115 = sphi 0, %s114
      %s131 = sphi 0, %s115
      %s135 = sphi 0, %s135
      %s137 = sphi 0, %s135
      %s138 = sphi 0, %s137
      %s152 = sphi 0, %s138
      %s158 = sphi 0, %s160
      %s161 = sphi 0, %s158
      %s162 = sphi 0, %s161
      %s178 = sphi 0, %s162
    $region4: #{feed_forward.1} parent=1 // loop_header_branch
      %14 = sbr.rel (%p12) target = $region8
    $region5: #{feed_forward.1} parent=1 // loop_body
      %s16 = ssub.s32 %s11, 1
      %s17 = ssub.s32 %s11, 2
      %s24 = sadd.s32 1, %s19
      %p25 = scmp.ge.s32.totalorder %s24, 1
      %s26 = scalar_select %p25, 0, %s24
      %s27 = sadd.s32 1, %s18
      %s28 = scalar_select %p25, %s27, %s18
      %p29 = scmp.ge.s32.totalorder %s28, 2
      %s30 = scalar_select %p29, 0, %s28
      %s31 = ssub.s32 %s18, %s30
      %p32 = scmp.eq.s32.totalorder %s31, 0
      %s34 = sadd.s32 %s33, 1
      %s35 = scalar_select %p32, %s33, %s34
      %p38 = pneg %p32
      %p39 = scmp.eq.s32.totalorder %s11, 1
      %p40 = por %p38, %p39
      %p41 = scmp.ne.s32.totalorder %s33, %s36
      %p42 = scmp.eq.s32.totalorder %s11, 0
      %p43 = por %p41, %p42
      %p44 = scmp.ne.s32.totalorder %s33, %s36
      %p45 = scmp.eq.s32.totalorder %s16, 1
      %p46 = por %p44, %p45
      %p47 = scmp.ne.s32.totalorder %s36, %s37
      %p48 = scmp.eq.s32.totalorder %s16, 0
      %p49 = por %p47, %p48
      %p50 = scmp.ne.s32.totalorder %s36, %s37
      %p51 = scmp.eq.s32.totalorder %s17, 1
      %p52 = por %p50, %p51
      %p54 = scmp.ne.s32.totalorder %s37, %s53
      %p55 = scmp.eq.s32.totalorder %s17, 0
      %p56 = por %p54, %p55
      %s57 = ssub.s32 %s19, %s26
      %p58 = scmp.eq.s32.totalorder %s57, 0
      %s60 = sadd.s32 %s59, 1
      %s61 = scalar_select %p58, %s59, %s60
      %p64 = pneg %p58
      %p65 = scmp.eq.s32.totalorder %s11, 1
      %p66 = por %p64, %p65
      %p67 = scmp.ne.s32.totalorder %s59, %s62
      %p68 = scmp.eq.s32.totalorder %s11, 0
      %p69 = por %p67, %p68
      %p70 = scmp.ne.s32.totalorder %s59, %s62
      %p71 = scmp.eq.s32.totalorder %s16, 1
      %p72 = por %p70, %p71
      %p73 = scmp.ne.s32.totalorder %s62, %s63
      %p74 = scmp.eq.s32.totalorder %s16, 0
      %p75 = por %p73, %p74
      %p76 = scmp.ne.s32.totalorder %s62, %s63
      %p77 = scmp.eq.s32.totalorder %s17, 1
      %p78 = por %p76, %p77
      %p80 = scmp.ne.s32.totalorder %s63, %s79
      %p81 = scmp.eq.s32.totalorder %s17, 0
      %p82 = por %p80, %p81
      %s83 = ssub.s32 %s19, %s26
      %p84 = scmp.eq.s32.totalorder %s83, 0
      %s86 = sadd.s32 %s85, 1
      %s87 = scalar_select %p84, %s85, %s86
      %p90 = pneg %p84
      %p91 = scmp.eq.s32.totalorder %s11, 1
      %p92 = por %p90, %p91
      %p93 = scmp.ne.s32.totalorder %s85, %s88
      %p94 = scmp.eq.s32.totalorder %s11, 0
      %p95 = por %p93, %p94
      %p96 = scmp.ne.s32.totalorder %s85, %s88
      %p97 = scmp.eq.s32.totalorder %s16, 1
      %p98 = por %p96, %p97
      %p99 = scmp.ne.s32.totalorder %s88, %s89
      %p100 = scmp.eq.s32.totalorder %s16, 0
      %p101 = por %p99, %p100
      %p102 = scmp.ne.s32.totalorder %s88, %s89
      %p103 = scmp.eq.s32.totalorder %s17, 1
      %p104 = por %p102, %p103
      %p106 = scmp.ne.s32.totalorder %s89, %s105
      %p107 = scmp.eq.s32.totalorder %s17, 0
      %p108 = por %p106, %p107
      %s109 = ssub.s32 %s19, %s26
      %p110 = scmp.eq.s32.totalorder %s109, 0
      %s112 = sadd.s32 %s111, 1
      %s113 = scalar_select %p110, %s111, %s112
      %p116 = pneg %p110
      %p117 = scmp.eq.s32.totalorder %s11, 1
      %p118 = por %p116, %p117
      %p119 = scmp.ne.s32.totalorder %s111, %s114
      %p120 = scmp.eq.s32.totalorder %s11, 0
      %p121 = por %p119, %p120
      %p122 = scmp.ne.s32.totalorder %s111, %s114
      %p123 = scmp.eq.s32.totalorder %s16, 1
      %p124 = por %p122, %p123
      %p125 = scmp.ne.s32.totalorder %s114, %s115
      %p126 = scmp.eq.s32.totalorder %s16, 0
      %p127 = por %p125, %p126
      %p128 = scmp.ne.s32.totalorder %s114, %s115
      %p129 = scmp.eq.s32.totalorder %s17, 1
      %p130 = por %p128, %p129
      %p132 = scmp.ne.s32.totalorder %s115, %s131
      %p133 = scmp.eq.s32.totalorder %s17, 0
      %p134 = por %p132, %p133
      %s136 = sadd.s32 %s135, 1
      %p139 = scmp.eq.s32.totalorder %s11, 1
      %p140 = scmp.ne.s32.totalorder %s135, %s137
      %p141 = scmp.eq.s32.totalorder %s11, 0
      %p142 = por %p140, %p141
      %p143 = scmp.ne.s32.totalorder %s135, %s137
      %p144 = scmp.eq.s32.totalorder %s16, 1
      %p145 = por %p143, %p144
      %p146 = scmp.ne.s32.totalorder %s137, %s138
      %p147 = scmp.eq.s32.totalorder %s16, 0
      %p148 = por %p146, %p147
      %p149 = scmp.ne.s32.totalorder %s137, %s138
      %p150 = scmp.eq.s32.totalorder %s17, 1
      %p151 = por %p149, %p150
      %p153 = scmp.ne.s32.totalorder %s138, %s152
      %p154 = scmp.eq.s32.totalorder %s17, 0
      %p155 = por %p153, %p154
      %s156 = ssub.s32 %s18, %s30
      %p157 = scmp.eq.s32.totalorder %s156, 0
      %s159 = sadd.s32 %s158, 1
      %s160 = scalar_select %p157, %s158, %s159
      %p163 = pneg %p157
      %p164 = scmp.eq.s32.totalorder %s11, 1
      %p165 = por %p163, %p164
      %p166 = scmp.ne.s32.totalorder %s158, %s161
      %p167 = scmp.eq.s32.totalorder %s11, 0
      %p168 = por %p166, %p167
      %p169 = scmp.ne.s32.totalorder %s158, %s161
      %p170 = scmp.eq.s32.totalorder %s16, 1
      %p171 = por %p169, %p170
      %p172 = scmp.ne.s32.totalorder %s161, %s162
      %p173 = scmp.eq.s32.totalorder %s16, 0
      %p174 = por %p172, %p173
      %p175 = scmp.ne.s32.totalorder %s161, %s162
      %p176 = scmp.eq.s32.totalorder %s17, 1
      %p177 = por %p175, %p176
      %p179 = scmp.ne.s32.totalorder %s162, %s178
      %p180 = scmp.eq.s32.totalorder %s17, 0
      %p181 = por %p179, %p180
      %p182 = scmp.le.s32.totalorder 1, %s11
      %p183 = scmp.lt.s32.totalorder %s11, 3
      %p184 = pnand %p182, %p183
      %p185 = pneg %p184
      // Predicated region
      $region9: #{feed_forward.1} parent=5 // pred_check
        _
      $region10: #{feed_forward.1} parent=5 // pred_check_branch
        %187 = sbr.rel (%p184) target = $region12
      $region11: #{feed_forward.1} parent=5 // pred_region
        %s188 = ssub.s32 %s11, 1
        // Predicated region
        $region13: #{feed_forward.1} parent=11 // pred_check
          %p189 = pneg %p75
        $region14: #{feed_forward.1} parent=11 // pred_check_branch
          %191 = sbr.rel (%p189) target = $region16
        $region15: #{feed_forward.1} parent=11 // pred_region
          %p192 = scmp.lt.s32.totalorder %s21, 0
          %s193 = scalar_select %p192, %s21, 0
          %s194 = smul.addr %s193, 8
          %s195 = scalar_lea.vmem %s1, %s194
        $region16: #{feed_forward.1} parent=11 // pred_fallthru
          _
        // Predicated region
        $region17: #{feed_forward.1} parent=11 // pred_check
          %p196 = pneg %p101
        $region18: #{feed_forward.1} parent=11 // pred_check_branch
          %198 = sbr.rel (%p196) target = $region20
        $region19: #{feed_forward.1} parent=11 // pred_region
          %p199 = scmp.lt.s32.totalorder %s21, 0
          %s200 = scalar_select %p199, %s21, 0
          %s201 = scalar_lea.vmem %s2, %s200
        $region20: #{feed_forward.1} parent=11 // pred_fallthru
          _
        // Predicated region
        $region21: #{feed_forward.1} parent=11 // pred_check
          %p202 = pneg %p127
        $region22: #{feed_forward.1} parent=11 // pred_check_branch
          %204 = sbr.rel (%p202) target = $region24
        $region23: #{feed_forward.1} parent=11 // pred_region
          %s205 = smul.u32 16, %s21
          %p206 = scmp.lt.s32.totalorder %s205, 15
          %s207 = scalar_select %p206, %s205, 15
          %s208 = smul.addr %s207, 8
          %s209 = scalar_lea.vmem %s3, %s208
          %s210 = smul.u32 16, %s21
        $region24: #{feed_forward.1} parent=11 // pred_fallthru
          _
        // Predicated region
        $region25: #{feed_forward.1} parent=11 // pred_check
          %p211 = pneg %p148
        $region26: #{feed_forward.1} parent=11 // pred_check_branch
          %213 = sbr.rel (%p211) target = $region28
        $region27: #{feed_forward.1} parent=11 // pred_region
          _
        $region28: #{feed_forward.1} parent=11 // pred_fallthru
          _
      $region12: #{feed_forward.1} parent=5 // pred_fallthru
        _
      %p214 = scmp.lt.s32.totalorder %s11, 2
      // Predicated region
      $region29: #{feed_forward.1} parent=5 // pred_check
        %p215 = pneg %p214
      $region30: #{feed_forward.1} parent=5 // pred_check_branch
        %217 = sbr.rel (%p215) target = $region32
      $region31: #{feed_forward.1} parent=5 // pred_region
        // Predicated region
        $region33: #{feed_forward.1} parent=31 // pred_check
          %p218 = pneg %p43
        $region34: #{feed_forward.1} parent=31 // pred_check_branch
          %220 = sbr.rel (%p218) target = $region36
        $region35: #{feed_forward.1} parent=31 // pred_region
          %s221 = smul.u32 2, %s18
          %s222 = ssub.s32 3, %s221
          %p223 = scmp.lt.s32.totalorder %s222, 2
          %s224 = scalar_select %p223, %s222, 2
          %s225 = smul.u32 128, %s224
          %p226 = scmp.lt.s32.totalorder %s221, 2
          %s227 = scalar_select %p226, %s221, 2
          %s228 = smul.addr %s227, 8
          %s229 = scalar_lea.vmem %s0, %s228
          %s230 = smul.u32 2, %s18
          %s231 = ssub.s32 3, %s230
          %p232 = scmp.lt.s32.totalorder %s231, 2
          %s233 = scalar_select %p232, %s231, 2
          %s234 = smul.u32 128, %s233
        $region36: #{feed_forward.1} parent=31 // pred_fallthru
          _
      $region32: #{feed_forward.1} parent=5 // pred_fallthru
        _
      %p235 = scmp.le.s32.totalorder 1, %s11
      %p236 = scmp.lt.s32.totalorder %s11, 3
      %p237 = pnand %p235, %p236
      %p238 = pneg %p237
      // Predicated region
      $region37: #{feed_forward.1} parent=5 // pred_check
        _
      $region38: #{feed_forward.1} parent=5 // pred_check_branch
        %240 = sbr.rel (%p237) target = $region40
      $region39: #{feed_forward.1} parent=5 // pred_region
        %s241 = ssub.s32 %s11, 1
        %s242 = smul.u32 2, %s20
        %s243 = ssub.s32 3, %s242
        %p244 = scmp.lt.s32.totalorder %s243, 2
        %s245 = scalar_select %p244, %s243, 2
        %s246 = smul.u32 128, %s245
        %p247 = scmp.lt.s32.totalorder %s242, 2
        %s248 = scalar_select %p247, %s242, 2
        %s249 = smul.addr %s248, 8
        %s250 = scalar_lea.vmem %s0, %s249
        %p251 = pneg %p49
        %p252 = pneg %p46
        %p253 = scmp.lt.s32.totalorder %s21, 0
        %s254 = scalar_select %p253, %s21, 0
        %s255 = smul.addr %s254, 8
        %s256 = scalar_lea.vmem %s1, %s255
        %p257 = pneg %p75
        %p258 = pneg %p72
        %p259 = scmp.lt.s32.totalorder %s21, 0
        %s260 = scalar_select %p259, %s21, 0
        %s261 = scalar_lea.vmem %s2, %s260
        %p262 = pneg %p101
        %p263 = pneg %p98
        %s264 = smul.u32 16, %s21
        %p265 = scmp.lt.s32.totalorder %s264, 15
        %s266 = scalar_select %p265, %s264, 15
        %s267 = smul.addr %s266, 8
        %s268 = scalar_lea.vmem %s3, %s267
        %p269 = pneg %p127
        %p270 = pneg %p124
        %p271 = pneg %p148
        %p272 = pneg %p145
        %p273 = pneg %p174
        %p274 = pneg %p171
        %s275 = sand.u32 %s161, 1
        %s276 = sand.u32 %s161, 1
        %s277 = smul.addr %s276, 16
        %s278 = scalar_lea.vmem [#allocation3], %s277
        %s279 = smul.u32 2, %s20
        %s280 = ssub.s32 3, %s279
        %p281 = scmp.lt.s32.totalorder %s280, 2
        %s282 = scalar_select %p281, %s280, 2
        %s283 = smul.u32 128, %s282
        %p284 = scmp.lt.s32.totalorder %s279, 2
        %s285 = scalar_select %p284, %s279, 2
        %s286 = smul.addr %s285, 8
        %s287 = scalar_lea.vmem %s0, %s286
        %s288 = smul.u32 2, %s20
        %s289 = ssub.s32 3, %s288
        %p290 = scmp.lt.s32.totalorder %s289, 2
        %s291 = scalar_select %p290, %s289, 2
        %s292 = smul.u32 128, %s291
        %p293 = scmp.lt.s32.totalorder %s21, 0
        %s294 = scalar_select %p293, %s21, 0
        %s295 = smul.addr %s294, 8
        %s296 = scalar_lea.vmem %s1, %s295
        %p297 = scmp.lt.s32.totalorder %s21, 0
        %s298 = scalar_select %p297, %s21, 0
        %s299 = scalar_lea.vmem %s2, %s298
        %s300 = smul.u32 16, %s21
        %p301 = scmp.lt.s32.totalorder %s300, 15
        %s302 = scalar_select %p301, %s300, 15
        %s303 = smul.addr %s302, 8
        %s304 = scalar_lea.vmem %s3, %s303
        %s305 = smul.u32 16, %s21
        %s306 = smul.u32 2, %s20
        %s307 = ssub.s32 3, %s306
        %p308 = scmp.lt.s32.totalorder %s307, 2
        %s309 = scalar_select %p308, %s307, 2
        %s310 = smul.u32 128, %s309
        %p311 = scmp.eq.s32.totalorder %s21, 0
        // Predicated region
        $region41: #{feed_forward.1} parent=39 // pred_check
          %p312 = pneg %p311
        $region42: #{feed_forward.1} parent=39 // pred_check_branch
          %314 = sbr.rel (%p312) target = $region44
        $region43: #{feed_forward.1} parent=39 // pred_region
          %315 = vst [vmem:[#allocation2] sm:$0xff] 0.0
          %316 = vst [vmem:[#allocation2 + $0x8] sm:$0xff] 0.0
        $region44: #{feed_forward.1} parent=39 // pred_fallthru
          _
        %v317 = vld [vmem:[%s287] sm:$0xff]
        %v318 = vld [vmem:[%s287 + $0x8] sm:$0xff]
        %v319 = vld [vmem:[%s296] sm:$0xff]
        %v320 = vld [vmem:[%s296 + $0x8] sm:$0xff]
        %v321 = vld [vmem:[%s296 + $0x10] sm:$0xff]
        %v322 = vld [vmem:[%s296 + $0x18] sm:$0xff]
        %v323 = vld [vmem:[%s296 + $0x20] sm:$0xff]
        %v324 = vld [vmem:[%s296 + $0x28] sm:$0xff]
        %v325 = vld [vmem:[%s296 + $0x30] sm:$0xff]
        %v326 = vld [vmem:[%s296 + $0x38] sm:$0xff]
        %v327 = vld [vmem:[%s296 + $0x40] sm:$0xff]
        %v328 = vld [vmem:[%s296 + $0x48] sm:$0xff]
        %v329 = vld [vmem:[%s296 + $0x50] sm:$0xff]
        %v330 = vld [vmem:[%s296 + $0x58] sm:$0xff]
        %v331 = vld [vmem:[%s296 + $0x60] sm:$0xff]
        %v332 = vld [vmem:[%s296 + $0x68] sm:$0xff]
        %v333 = vld [vmem:[%s296 + $0x70] sm:$0xff]
        %v334 = vld [vmem:[%s296 + $0x78] sm:$0xff]
        %v335 = vld [vmem:[%s299] sm:$0x1]
        %v337 = vlaneseq
        %v338 = vshrl.u32 %v337, 7
        %v339 = vsub.s32 0, %v338
        %v340 = vrot.slane %v335, %v339
        %342 = vmatprep.subr.mxu0 0.0
        %343 = vmatpush1.msra.mxu0 %v334
        %344 = vmatprep.subr.mxu0 0.0
        %345 = vmatpush1.msra.mxu0 %v333
        %346 = vmatprep.subr.mxu0 0.0
        %347 = vmatpush1.msra.mxu0 %v332
        %348 = vmatprep.subr.mxu0 0.0
        %349 = vmatpush1.msra.mxu0 %v331
        %350 = vmatprep.subr.mxu0 0.0
        %351 = vmatpush1.msra.mxu0 %v330
        %352 = vmatprep.subr.mxu0 0.0
        %353 = vmatpush1.msra.mxu0 %v329
        %354 = vmatprep.subr.mxu0 0.0
        %355 = vmatpush1.msra.mxu0 %v328
        %356 = vmatprep.subr.mxu0 0.0
        %357 = vmatpush1.msra.mxu0 %v327
        %358 = vmatprep.subr.mxu0 0.0
        %359 = vmatpush1.msra.mxu0 %v326
        %360 = vmatprep.subr.mxu0 0.0
        %361 = vmatpush1.msra.mxu0 %v325
        %362 = vmatprep.subr.mxu0 0.0
        %363 = vmatpush1.msra.mxu0 %v324
        %364 = vmatprep.subr.mxu0 0.0
        %365 = vmatpush1.msra.mxu0 %v323
        %366 = vmatprep.subr.mxu0 0.0
        %367 = vmatpush1.msra.mxu0 %v322
        %368 = vmatprep.subr.mxu0 0.0
        %369 = vmatpush1.msra.mxu0 %v321
        %370 = vmatprep.subr.mxu0 0.0
        %371 = vmatpush1.msra.mxu0 %v320
        %372 = vmatprep.subr.mxu0 0.0
        %373 = vmatpush1.msra.mxu0 %v319
        %374 = vmatprep.subr.mxu0 0.0
        %375 = vmatpush2.msra.mxu0 0.0
        %376 = vmatprep.subr.mxu0 0.0
        %377 = vmatpush2.msra.mxu0 0.0
        %378 = vmatprep.subr.mxu0 0.0
        %379 = vmatpush2.msra.mxu0 0.0
        %380 = vmatprep.subr.mxu0 0.0
        %381 = vmatpush2.msra.mxu0 0.0
        %382 = vmatprep.subr.mxu0 0.0
        %383 = vmatpush2.msra.mxu0 0.0
        %384 = vmatprep.subr.mxu0 0.0
        %385 = vmatpush2.msra.mxu0 0.0
        %386 = vmatprep.subr.mxu0 0.0
        %387 = vmatpush2.msra.mxu0 0.0
        %388 = vmatprep.subr.mxu0 0.0
        %389 = vmatpush2.msra.mxu0 0.0
        %390 = vmatprep.subr.mxu0 0.0
        %391 = vmatpush2.msra.mxu0 0.0
        %392 = vmatprep.subr.mxu0 0.0
        %393 = vmatpush2.msra.mxu0 0.0
        %394 = vmatprep.subr.mxu0 0.0
        %395 = vmatpush2.msra.mxu0 0.0
        %396 = vmatprep.subr.mxu0 0.0
        %397 = vmatpush2.msra.mxu0 0.0
        %398 = vmatprep.subr.mxu0 0.0
        %399 = vmatpush2.msra.mxu0 0.0
        %400 = vmatprep.subr.mxu0 0.0
        %401 = vmatpush2.msra.mxu0 0.0
        %402 = vmatprep.subr.mxu0 0.0
        %403 = vmatpush2.msra.mxu0 0.0
        %404 = vmatprep.subr.mxu0 0.0
        %405 = vmatpush2.msra.mxu0 0.0
        %406 = vmatprep.mubr.f32.mxu0 0.0
        %407 = vmatmul.mubr.f32.gmra.mxu0 %v317
        %v408 = vpop.f32.mrf.mxu0
        %v409 = vadd.f32 %v340, %v408
        %v410 = vpop.f32.mrf.mxu0
        %411 = vmatprep.mubr.f32.mxu0 0.0
        %412 = vmatmul.mubr.f32.gmra.mxu0 %v318
        %v413 = vpop.f32.mrf.mxu0
        %v414 = vadd.f32 %v340, %v413
        %v415 = vpop.f32.mrf.mxu0
        %416 = vdwg.mxu0
        %v417 = vmax.f32 %v409, 0.0
        %v418 = vmax.f32 %v414, 0.0
        %v419 = vld [vmem:[#allocation2] sm:$0xff]
        %v420 = vld [vmem:[#allocation2 + $0x8] sm:$0xff]
        %v421 = vld [vmem:[%s304] sm:$0xff]
        %v422 = vld [vmem:[%s304 + $0x8] sm:$0xff]
        %v423 = vld [vmem:[%s304 + $0x10] sm:$0xff]
        %v424 = vld [vmem:[%s304 + $0x18] sm:$0xff]
        %v425 = vld [vmem:[%s304 + $0x20] sm:$0xff]
        %v426 = vld [vmem:[%s304 + $0x28] sm:$0xff]
        %v427 = vld [vmem:[%s304 + $0x30] sm:$0xff]
        %v428 = vld [vmem:[%s304 + $0x38] sm:$0xff]
        %v429 = vld [vmem:[%s304 + $0x40] sm:$0xff]
        %v430 = vld [vmem:[%s304 + $0x48] sm:$0xff]
        %v431 = vld [vmem:[%s304 + $0x50] sm:$0xff]
        %v432 = vld [vmem:[%s304 + $0x58] sm:$0xff]
        %v433 = vld [vmem:[%s304 + $0x60] sm:$0xff]
        %v434 = vld [vmem:[%s304 + $0x68] sm:$0xff]
        %v435 = vld [vmem:[%s304 + $0x70] sm:$0xff]
        %v436 = vld [vmem:[%s304 + $0x78] sm:$0xff]
        %437 = vmatprep.subr.mxu0 0.0
        %438 = vmatpush1.msra.mxu0 %v436
        %439 = vmatprep.subr.mxu0 0.0
        %440 = vmatpush1.msra.mxu0 %v435
        %441 = vmatprep.subr.mxu0 0.0
        %442 = vmatpush1.msra.mxu0 %v434
        %443 = vmatprep.subr.mxu0 0.0
        %444 = vmatpush1.msra.mxu0 %v433
        %445 = vmatprep.subr.mxu0 0.0
        %446 = vmatpush1.msra.mxu0 %v432
        %447 = vmatprep.subr.mxu0 0.0
        %448 = vmatpush1.msra.mxu0 %v431
        %449 = vmatprep.subr.mxu0 0.0
        %450 = vmatpush1.msra.mxu0 %v430
        %451 = vmatprep.subr.mxu0 0.0
        %452 = vmatpush1.msra.mxu0 %v429
        %453 = vmatprep.subr.mxu0 0.0
        %454 = vmatpush1.msra.mxu0 %v428
        %455 = vmatprep.subr.mxu0 0.0
        %456 = vmatpush1.msra.mxu0 %v427
        %457 = vmatprep.subr.mxu0 0.0
        %458 = vmatpush1.msra.mxu0 %v426
        %459 = vmatprep.subr.mxu0 0.0
        %460 = vmatpush1.msra.mxu0 %v425
        %461 = vmatprep.subr.mxu0 0.0
        %462 = vmatpush1.msra.mxu0 %v424
        %463 = vmatprep.subr.mxu0 0.0
        %464 = vmatpush1.msra.mxu0 %v423
        %465 = vmatprep.subr.mxu0 0.0
        %466 = vmatpush1.msra.mxu0 %v422
        %467 = vmatprep.subr.mxu0 0.0
        %468 = vmatpush1.msra.mxu0 %v421
        %469 = vmatprep.subr.mxu0 0.0
        %470 = vmatpush2.msra.mxu0 0.0
        %471 = vmatprep.subr.mxu0 0.0
        %472 = vmatpush2.msra.mxu0 0.0
        %473 = vmatprep.subr.mxu0 0.0
        %474 = vmatpush2.msra.mxu0 0.0
        %475 = vmatprep.subr.mxu0 0.0
        %476 = vmatpush2.msra.mxu0 0.0
        %477 = vmatprep.subr.mxu0 0.0
        %478 = vmatpush2.msra.mxu0 0.0
        %479 = vmatprep.subr.mxu0 0.0
        %480 = vmatpush2.msra.mxu0 0.0
        %481 = vmatprep.subr.mxu0 0.0
        %482 = vmatpush2.msra.mxu0 0.0
        %483 = vmatprep.subr.mxu0 0.0
        %484 = vmatpush2.msra.mxu0 0.0
        %485 = vmatprep.subr.mxu0 0.0
        %486 = vmatpush2.msra.mxu0 0.0
        %487 = vmatprep.subr.mxu0 0.0
        %488 = vmatpush2.msra.mxu0 0.0
        %489 = vmatprep.subr.mxu0 0.0
        %490 = vmatpush2.msra.mxu0 0.0
        %491 = vmatprep.subr.mxu0 0.0
        %492 = vmatpush2.msra.mxu0 0.0
        %493 = vmatprep.subr.mxu0 0.0
        %494 = vmatpush2.msra.mxu0 0.0
        %495 = vmatprep.subr.mxu0 0.0
        %496 = vmatpush2.msra.mxu0 0.0
        %497 = vmatprep.subr.mxu0 0.0
        %498 = vmatpush2.msra.mxu0 0.0
        %499 = vmatprep.subr.mxu0 0.0
        %500 = vmatpush2.msra.mxu0 0.0
        %501 = vmatprep.mubr.f32.mxu0 0.0
        %502 = vmatmul.mubr.f32.gmra.mxu0 %v417
        %v503 = vpop.f32.mrf.mxu0
        %v504 = vadd.f32 0.0, %v503
        %v505 = vpop.f32.mrf.mxu0
        %506 = vmatprep.mubr.f32.mxu0 0.0
        %507 = vmatmul.mubr.f32.gmra.mxu0 %v418
        %v508 = vpop.f32.mrf.mxu0
        %v509 = vadd.f32 0.0, %v508
        %v510 = vpop.f32.mrf.mxu0
        %511 = vdwg.mxu0
        %v512 = vadd.f32 %v419, %v504
        %v513 = vadd.f32 %v420, %v509
        %514 = vst [vmem:[#allocation2] sm:$0xff] %v512
        %515 = vst [vmem:[#allocation2 + $0x8] sm:$0xff] %v513
        // Predicated region
        $region45: #{feed_forward.1} parent=39 // pred_check
          %p516 = pneg %p311
        $region46: #{feed_forward.1} parent=39 // pred_check_branch
          %518 = sbr.rel (%p516) target = $region48
        $region47: #{feed_forward.1} parent=39 // pred_region
          %v519 = vld [vmem:[#allocation2] sm:$0xff]
          %v520 = vld [vmem:[#allocation2 + $0x8] sm:$0xff]
          %v521 = vld [vmem:[%s4] sm:$0x1]
          %v523 = vlaneseq
          %v524 = vshrl.u32 %v523, 7
          %v525 = vsub.s32 0, %v524
          %v526 = vrot.slane %v521, %v525
          %v528 = vadd.f32 %v519, %v526
          %v529 = vadd.f32 %v520, %v526
          %530 = vst [vmem:[%s278] sm:$0xff] %v528
          %531 = vst [vmem:[%s278 + $0x8] sm:$0xff] %v529
        $region48: #{feed_forward.1} parent=39 // pred_fallthru
          _
        %s532 = sand.u32 %s161, 1
        %s533 = sand.u32 %s161, 1
        %s534 = smul.addr %s533, 16
        %s535 = scalar_lea.vmem [#allocation3], %s534
        // Predicated region
        $region49: #{feed_forward.1} parent=39 // pred_check
          %p536 = pneg %p171
        $region50: #{feed_forward.1} parent=39 // pred_check_branch
          %538 = sbr.rel (%p536) target = $region52
        $region51: #{feed_forward.1} parent=39 // pred_region
          %s539 = smul.u32 2, %s20
          %s540 = ssub.s32 3, %s539
          %p541 = scmp.lt.s32.totalorder %s540, 2
          %s542 = scalar_select %p541, %s540, 2
          %s543 = smul.u32 128, %s542
          %p544 = scmp.ne.s32.totalorder 0, %s543
          %s545 = smul.addr %s539, 8
          %s546 = scalar_lea.vmem %s5, %s545
          // Predicated region
          $region53: #{feed_forward.1} parent=51 // pred_check
            %p547 = pneg %p544
          $region54: #{feed_forward.1} parent=51 // pred_check_branch
            %549 = sbr.rel (%p547) target = $region56
          $region55: #{feed_forward.1} parent=51 // pred_region
            // Predicated region
            $region57: #{feed_forward.1} parent=55 // pred_check
              _
            $region58: #{feed_forward.1} parent=55 // pred_check_branch
              %551 = sbr.rel (0) target = $region60
            $region59: #{feed_forward.1} parent=55 // pred_region
              // Predicated region
              $region79: #{feed_forward.1} parent=59 // pred_check
                _
              $region80: #{feed_forward.1} parent=59 // pred_check_branch
                %603 = sbr.rel (0) target = $region82
              $region81: #{feed_forward.1} parent=59 // pred_region
                %s604 = sshrl.u32 %s542, 1
                // While loop
                $region83: #{feed_forward.1} parent=81 // loop_pre_header
                  _
                $region84: #{feed_forward.1} parent=81 // loop_header
                  %s606 = sphi 0, %s608
                  %p607 = scmp.ge.s32.totalorder %s606, %s604
                  %s611 = sphi 0, %s620
                  %s612 = sphi %s535, %s623
                  %s613 = sphi %s546, %s624
                $region85: #{feed_forward.1} parent=81 // loop_header_branch
                  %610 = sbr.rel (%p607) target = $region89
                $region86: #{feed_forward.1} parent=81 // loop_body
                  %v614 = vld [vmem:[%s612] sm:$0xff]
                  %615 = vst [vmem:[%s613] sm:$0xff] %v614
                  %v616 = vld [vmem:[%s612 + $0x8] sm:$0xff]
                  %617 = vst [vmem:[%s613 + $0x8] sm:$0xff] %v616
                  %s618 = sadd.s32 1, %s611
                  %p619 = scmp.ge.s32.totalorder %s618, %s604
                  %s620 = scalar_select %p619, 0, %s618
                  %s621 = smul.u32 %s620, 16
                  %s622 = smul.u32 %s620, 16
                  %s623 = scalar_lea.vmem %s535, %s621 [#allocation3]
                  %s624 = scalar_lea.vmem %s546, %s622
                $region87: #{feed_forward.1} parent=81 // loop_footer
                  %s608 = sadd.s32 %s606, 1
                $region88: #{feed_forward.1} parent=81 // loop_footer_branch
                  %605 = sbr.rel target = $region84
                $region89: #{feed_forward.1} parent=81 // loop_exit
                  _
                %s625 = sshrl.u32 %s542, 1
                %s626 = sand.u32 %s542, 1
                %s627 = smul.u32 %s625, 2
                %s628 = smul.u32 8, %s627
                %s629 = scalar_lea.vmem %s535, %s628 [#allocation3]
                %s630 = smul.u32 8, %s627
                %s631 = scalar_lea.vmem %s546, %s630
                // While loop
                $region90: #{feed_forward.1} parent=81 // loop_pre_header
                  _
                $region91: #{feed_forward.1} parent=81 // loop_header
                  %s633 = sphi 0, %s635
                  %p634 = scmp.ge.s32.totalorder %s633, %s626
                  %s638 = sphi 0, %s645
                  %s639 = sphi %s629, %s648
                  %s640 = sphi %s631, %s649
                $region92: #{feed_forward.1} parent=81 // loop_header_branch
                  %637 = sbr.rel (%p634) target = $region96
                $region93: #{feed_forward.1} parent=81 // loop_body
                  %v641 = vld [vmem:[%s639] sm:$0xff]
                  %642 = vst [vmem:[%s640] sm:$0xff] %v641
                  %s643 = sadd.s32 1, %s638
                  %p644 = scmp.ge.s32.totalorder %s643, %s626
                  %s645 = scalar_select %p644, 0, %s643
                  %s646 = smul.u32 %s645, 8
                  %s647 = smul.u32 %s645, 8
                  %s648 = scalar_lea.vmem %s629, %s646 [#allocation3]
                  %s649 = scalar_lea.vmem %s631, %s647
                $region94: #{feed_forward.1} parent=81 // loop_footer
                  %s635 = sadd.s32 %s633, 1
                $region95: #{feed_forward.1} parent=81 // loop_footer_branch
                  %632 = sbr.rel target = $region91
                $region96: #{feed_forward.1} parent=81 // loop_exit
                  _
              $region82: #{feed_forward.1} parent=59 // pred_fallthru
                _
              // Predicated region
              $region97: #{feed_forward.1} parent=59 // pred_check
                _
              $region98: #{feed_forward.1} parent=59 // pred_check_branch
                %651 = sbr.rel target = $region100
              $region99: #{feed_forward.1} parent=59 // pred_region
                _
              $region100: #{feed_forward.1} parent=59 // pred_fallthru
                _
            $region60: #{feed_forward.1} parent=55 // pred_fallthru
              _
            // Predicated region
            $region61: #{feed_forward.1} parent=55 // pred_check
              _
            $region62: #{feed_forward.1} parent=55 // pred_check_branch
              %553 = sbr.rel target = $region64
            $region63: #{feed_forward.1} parent=55 // pred_region
              %s555 = ssub.s32 256, 1
              %s556 = sshrl.u32 %s542, 1
              // While loop
              $region65: #{feed_forward.1} parent=63 // loop_pre_header
                _
              $region66: #{feed_forward.1} parent=63 // loop_header
                %s558 = sphi 0, %s560
                %p559 = scmp.ge.s32.totalorder %s558, %s556
                %s563 = sphi 0, %s572
                %s564 = sphi %s535, %s575
                %s565 = sphi %s546, %s576
              $region67: #{feed_forward.1} parent=63 // loop_header_branch
                %562 = sbr.rel (%p559) target = $region71
              $region68: #{feed_forward.1} parent=63 // loop_body
                %v566 = vld [vmem:[%s564] sm:%s555]
                %567 = vst [vmem:[%s565] sm:%s555] %v566
                %v568 = vld [vmem:[%s564 + $0x8] sm:%s555]
                %569 = vst [vmem:[%s565 + $0x8] sm:%s555] %v568
                %s570 = sadd.s32 1, %s563
                %p571 = scmp.ge.s32.totalorder %s570, %s556
                %s572 = scalar_select %p571, 0, %s570
                %s573 = smul.u32 %s572, 16
                %s574 = smul.u32 %s572, 16
                %s575 = scalar_lea.vmem %s535, %s573 [#allocation3]
                %s576 = scalar_lea.vmem %s546, %s574
              $region69: #{feed_forward.1} parent=63 // loop_footer
                %s560 = sadd.s32 %s558, 1
              $region70: #{feed_forward.1} parent=63 // loop_footer_branch
                %557 = sbr.rel target = $region66
              $region71: #{feed_forward.1} parent=63 // loop_exit
                _
              %s577 = sshrl.u32 %s542, 1
              %s578 = sand.u32 %s542, 1
              %s579 = smul.u32 %s577, 2
              %s580 = smul.u32 8, %s579
              %s581 = scalar_lea.vmem %s535, %s580 [#allocation3]
              %s582 = smul.u32 8, %s579
              %s583 = scalar_lea.vmem %s546, %s582
              // While loop
              $region72: #{feed_forward.1} parent=63 // loop_pre_header
                _
              $region73: #{feed_forward.1} parent=63 // loop_header
                %s585 = sphi 0, %s587
                %p586 = scmp.ge.s32.totalorder %s585, %s578
                %s590 = sphi 0, %s597
                %s591 = sphi %s581, %s600
                %s592 = sphi %s583, %s601
              $region74: #{feed_forward.1} parent=63 // loop_header_branch
                %589 = sbr.rel (%p586) target = $region78
              $region75: #{feed_forward.1} parent=63 // loop_body
                %v593 = vld [vmem:[%s591] sm:%s555]
                %594 = vst [vmem:[%s592] sm:%s555] %v593
                %s595 = sadd.s32 1, %s590
                %p596 = scmp.ge.s32.totalorder %s595, %s578
                %s597 = scalar_select %p596, 0, %s595
                %s598 = smul.u32 %s597, 8
                %s599 = smul.u32 %s597, 8
                %s600 = scalar_lea.vmem %s581, %s598 [#allocation3]
                %s601 = scalar_lea.vmem %s583, %s599
              $region76: #{feed_forward.1} parent=63 // loop_footer
                %s587 = sadd.s32 %s585, 1
              $region77: #{feed_forward.1} parent=63 // loop_footer_branch
                %584 = sbr.rel target = $region73
              $region78: #{feed_forward.1} parent=63 // loop_exit
                _
            $region64: #{feed_forward.1} parent=55 // pred_fallthru
              _
          $region56: #{feed_forward.1} parent=51 // pred_fallthru
            _
          %652 = vnop
        $region52: #{feed_forward.1} parent=39 // pred_fallthru
          _
      $region40: #{feed_forward.1} parent=5 // pred_fallthru
        _
      %p653 = scmp.le.s32.totalorder 2, %s11
      // Predicated region
      $region101: #{feed_forward.1} parent=5 // pred_check
        %p654 = pneg %p653
      $region102: #{feed_forward.1} parent=5 // pred_check_branch
        %656 = sbr.rel (%p654) target = $region104
      $region103: #{feed_forward.1} parent=5 // pred_region
        %s657 = ssub.s32 %s11, 2
        // Predicated region
        $region105: #{feed_forward.1} parent=103 // pred_check
          %p658 = pneg %p177
        $region106: #{feed_forward.1} parent=103 // pred_check_branch
          %660 = sbr.rel (%p658) target = $region108
        $region107: #{feed_forward.1} parent=103 // pred_region
          %s661 = sand.u32 %s162, 1
          %s662 = sand.u32 %s162, 1
          %s663 = smul.addr %s662, 16
          %s664 = scalar_lea.vmem [#allocation3], %s663
        $region108: #{feed_forward.1} parent=103 // pred_fallthru
          _
      $region104: #{feed_forward.1} parent=5 // pred_fallthru
        _
    $region6: #{feed_forward.1} parent=1 // loop_footer
      %s15 = sadd.s32 1, %s11
    $region7: #{feed_forward.1} parent=1 // loop_footer_branch
      %10 = sbr.rel target = $region3
    $region8: #{feed_forward.1} parent=1 // loop_exit
      _

</llo_original>
